<compile_context>
chip_gen: v7x
topology: tpu7x:2x2x1
jax: 0.10.0
libtpu: 0.0.40
codegen_flags: <defaults>
</compile_context>

<pallas_src>
import jax
import jax.numpy as jnp
from jax.experimental import pallas as pl
from jax.experimental.pallas import tpu as pltpu


def _round_up(n, m):
    return ((n + m - 1) // m) * m


def _pad_to(a, shape):
    return jnp.pad(a, [(0, s - d) for d, s in zip(a.shape, shape)])


def _estep_kernel(xT_ref, wT_ref, prior_ref, eui_ref, tll_ref, cll_ref):
    """One (stream, row-tile) grid step of the first-layer E-CGMM E-step.

    Lane-dense layout: rows (nodes / edges) on the 128-lane axis, states /
    features on the sublane axis. Zero-padded rows / features / states
    contribute exactly nothing to any output.
    """
    xT = xT_ref[...]                                    # [Kp, T]  observations^T
    wT = wT_ref[...]                                    # [Cp, Kp] emission params
    # emission^T: p(x_u | Q=c) -> [Cp, T]   (MXU matmul, K on the contraction)
    emis = jnp.dot(wT, xT, preferred_element_type=jnp.float32)
    prior = prior_ref[...]                              # [Cp, 1]  BaseTransition prior
    unnorm = emis * prior                               # [Cp, T]  emission * prior
    Z = jnp.sum(unnorm, axis=0, keepdims=True)          # [1, T]
    Zs = jnp.where(Z == 0.0, 1.0, Z)                    # Z[Z == 0] = 1
    eui = unnorm * pl.reciprocal(Zs)                    # posterior responsibilities
    eui_ref[...] = eui.astype(eui_ref.dtype)

    # true-LL partial: sum_u log Z_u  (padded rows have Zs == 1 -> contribute 0)
    tll_ref[...] = jnp.sum(jnp.log(Zs), keepdims=True).astype(tll_ref.dtype)
    # complete-LL partial:
    #   sum eui*log(emission) + sum eui*log(prior) == sum eui*log(emission*prior)
    # guarded so padded / zero entries follow the 0*log(0) = 0 convention.
    log_un = jnp.where(unnorm > 0.0, jnp.log(unnorm), 0.0)
    cll_ref[...] = jnp.sum(eui * log_un, keepdims=True).astype(cll_ref.dtype)


def ecgmm_estep_fused(node_x, edge_x, node_w, edge_w, node_prior, edge_prior,
                      *, max_tile=512):
    """Fused first-layer E-CGMM E-step over the node and edge streams.

    node_x: [N, K]   edge_x: [E, Ke]
    node_w: [C, K]   (row c = p(x | Q=c))        edge_w: [CA, Ke]
    node_prior: [1, C]                           edge_prior: [1, CA]

    Returns (node_eui [N, C], edge_eui [E, CA],
             true_ll partials [2, n_tiles, 1, 1], complete_ll partials [...]).
    """
    N, K = node_x.shape
    E, Ke = edge_x.shape
    C = node_w.shape[0]
    CA = edge_w.shape[0]

    f32 = jnp.float32
    Kp = _round_up(max(K, Ke), 8)            # features -> sublane multiple of 8
    Cp = _round_up(max(C, CA), 8)            # states   -> sublane multiple of 8
    max_tile = _round_up(max_tile, 128)
    R = max(N, E)
    tile = min(max_tile, _round_up(R, 128))  # rows -> lane multiple of 128
    Rp = _round_up(R, tile)
    n_tiles = Rp // tile

    # host-side layout plumbing: rows onto the lane axis, zero-pad to common shapes
    xT = jnp.stack([_pad_to(node_x.astype(f32), (Rp, Kp)).T,
                    _pad_to(edge_x.astype(f32), (Rp, Kp)).T])       # [2, Kp, Rp]
    wT = jnp.stack([_pad_to(node_w.astype(f32), (Cp, Kp)),
                    _pad_to(edge_w.astype(f32), (Cp, Kp))])         # [2, Cp, Kp]
    pr = jnp.stack([_pad_to(node_prior.astype(f32).T, (Cp, 1)),
                    _pad_to(edge_prior.astype(f32).T, (Cp, 1))])    # [2, Cp, 1]

    euiT, tll, cll = pl.pallas_call(
        _estep_kernel,
        out_shape=(
            jax.ShapeDtypeStruct((2, Cp, Rp), f32),           # eui^T  (lane-dense)
            jax.ShapeDtypeStruct((2, n_tiles, 1, 1), f32),    # true-LL partials
            jax.ShapeDtypeStruct((2, n_tiles, 1, 1), f32),    # complete-LL partials
        ),
        grid_spec=pltpu.PrefetchScalarGridSpec(
            num_scalar_prefetch=0,
            grid=(2, n_tiles),                                # (stream, row tile)
            in_specs=[
                pl.BlockSpec((None, Kp, tile), lambda s, t: (s, 0, t)),
                pl.BlockSpec((None, Cp, Kp), lambda s, t: (s, 0, 0)),
                pl.BlockSpec((None, Cp, 1), lambda s, t: (s, 0, 0)),
            ],
            out_specs=(
                pl.BlockSpec((None, Cp, tile), lambda s, t: (s, 0, t)),
                pl.BlockSpec((None, None, 1, 1), lambda s, t: (s, t, 0, 0)),
                pl.BlockSpec((None, None, 1, 1), lambda s, t: (s, t, 0, 0)),
            ),
        ),
        compiler_params=pltpu.CompilerParams(
            # LL outputs are per-tile partial sums (no carried state), so every
            # grid point writes disjoint blocks: both axes are safely parallel
            # (v7x megacore splits the row tiles; no-op on v5e/v6e).
            dimension_semantics=("parallel", "parallel"),
        ),
    )(xT, wT, pr)

    node_eui = euiT[0, :C, :N].T             # back to [rows, states] for the caller
    edge_eui = euiT[1, :CA, :E].T
    return node_eui, edge_eui, tll, cll


def ecgmm_forward(x, edge_attr, edge_index, batch, y, params, *, max_tile=512):
    """Mirrors ECGMM.forward / e_step for the first layer, eval mode,
    node-level task, return_node_embeddings=False."""
    edge_batch = batch[edge_index[0]]        # computed for fidelity; unused here
    del y, edge_batch

    node_eui, edge_eui, tll, cll = ecgmm_estep_fused(
        x, edge_attr,
        params["node_emission"], params["edge_emission"],
        params["node_prior"], params["edge_prior"],
        max_tile=max_tile)

    # readout.infer: p(y|u) = p_Q_given_obs @ p(y|Q).  On the first layer the
    # BaseTransition posterior is the row-constant prior, so this collapses to
    # a single [1,C]x[C,Y] dot broadcast to all rows (hoisted out of the kernel).
    node_likely_labels = jnp.broadcast_to(
        jnp.dot(params["node_prior"], params["node_target"]),
        (x.shape[0], params["node_target"].shape[1]))
    _edge_likely_labels = jnp.broadcast_to(   # computed by the module, not returned
        jnp.dot(params["edge_prior"], params["edge_target"]),
        (edge_attr.shape[0], params["edge_target"].shape[1]))
    del _edge_likely_labels

    true_log_likelihood = jnp.sum(tll)        # node + edge streams
    complete_log_likelihood = jnp.sum(cll)
    num_nodes = x.shape[0]
    embeddings = None                         # return_node_embeddings == False

    return ((node_likely_labels, embeddings, complete_log_likelihood,
             true_log_likelihood, num_nodes),
            node_eui, edge_eui)


if __name__ == "__main__":
    # small shapes consistent with the module's __init__ (C, CA, K, Ke, Y)
    N, E = 16, 24              # nodes, edges
    K, Ke = 8, 6               # dim_node_features, dim_edge_features
    Y = 3                      # dim_target
    C, CA = 5, 4               # node / edge state counts

    key = jax.random.PRNGKey(0)
    keys = jax.random.split(key, 10)

    # positive, row-stochastic observations -> strictly positive likelihoods
    x = jax.nn.softmax(jax.random.normal(keys[0], (N, K)), axis=-1).astype(jnp.float32)
    edge_attr = jax.nn.softmax(jax.random.normal(keys[1], (E, Ke)), axis=-1).astype(jnp.float32)
    y = jax.random.randint(keys[2], (N,), 0, Y)
    edge_index = jax.random.randint(keys[3], (2, E), 0, N)
    batch = jnp.concatenate([jnp.zeros((N // 2,), jnp.int32),
                             jnp.ones((N - N // 2,), jnp.int32)])

    params = {
        "node_emission": jax.nn.softmax(jax.random.normal(keys[4], (C, K)), axis=-1).astype(jnp.float32),
        "edge_emission": jax.nn.softmax(jax.random.normal(keys[5], (CA, Ke)), axis=-1).astype(jnp.float32),
        "node_prior": jax.nn.softmax(jax.random.normal(keys[6], (1, C)), axis=-1).astype(jnp.float32),
        "edge_prior": jax.nn.softmax(jax.random.normal(keys[7], (1, CA)), axis=-1).astype(jnp.float32),
        "node_target": jax.nn.softmax(jax.random.normal(keys[8], (C, Y)), axis=-1).astype(jnp.float32),
        "edge_target": jax.nn.softmax(jax.random.normal(keys[9], (CA, Y)), axis=-1).astype(jnp.float32),
    }

    out, node_eui, edge_eui = ecgmm_forward(x, edge_attr, edge_index, batch, y, params)
    node_likely_labels, embeddings, complete_ll, true_ll, num_nodes = out
    jax.block_until_ready((node_likely_labels, complete_ll, true_ll, node_eui, edge_eui))

    # pure-JAX reference of the same first-layer E-step (row-major layout)
    def ref_stream(feats, w_cx, prior_1c):
        emission = feats @ w_cx.T
        p_Q = jnp.broadcast_to(prior_1c, emission.shape)
        unnorm = emission * p_Q
        Z = unnorm.sum(1, keepdims=True)
        Zs = jnp.where(Z == 0.0, 1.0, Z)
        eui = unnorm / Zs
        tll = jnp.sum(jnp.log(Zs))
        cll = jnp.sum(eui * jnp.log(emission)) + jnp.sum(eui * jnp.log(p_Q))
        return eui, tll, cll

    n_eui_r, n_tll_r, n_cll_r = ref_stream(x, params["node_emission"], params["node_prior"])
    e_eui_r, e_tll_r, e_cll_r = ref_stream(edge_attr, params["edge_emission"], params["edge_prior"])

    assert bool(jnp.allclose(node_eui, n_eui_r, atol=5e-3))
    assert bool(jnp.allclose(edge_eui, e_eui_r, atol=5e-3))
    assert bool(jnp.allclose(true_ll, n_tll_r + e_tll_r, rtol=5e-3, atol=5e-2))
    assert bool(jnp.allclose(complete_ll, n_cll_r + e_cll_r, rtol=5e-3, atol=5e-2))

    # same invariants the PyTorch module asserts
    assert bool(jnp.allclose(node_eui.sum(1), 1.0, atol=1e-5))
    assert bool(jnp.allclose(edge_eui.sum(1), 1.0, atol=1e-5))
    assert bool(jnp.isfinite(complete_ll)) and bool(jnp.isfinite(true_ll))
    assert node_likely_labels.shape == (N, Y) and num_nodes == N

    print("KERNEL_OK")
</pallas_src>

<mosaic_0001>
module attributes {stable_mosaic.version = 11 : i64} {
  func.func @_estep_kernel(%arg0: i32, %arg1: i32, %arg2: memref<1x8x128xf32, #tpu.memory_space<vmem>>, %arg3: memref<1x8x8xf32, #tpu.memory_space<vmem>>, %arg4: memref<1x8x1xf32, #tpu.memory_space<vmem>>, %arg5: memref<1x8x128xf32, #tpu.memory_space<vmem>>, %arg6: memref<1x1x1x1xf32, #tpu.memory_space<vmem>>, %arg7: memref<1x1x1x1xf32, #tpu.memory_space<vmem>>) attributes {dimension_semantics = [#tpu.dimension_semantics<parallel>, #tpu.dimension_semantics<parallel>], iteration_bounds = array<i64: 2, 1>, scalar_prefetch = 0 : i64, scratch_operands = 0 : i64, tpu.core_type = #tpu.core_type<tc>, window_params = [{transform_indices = @transform_0, window_bounds = array<i64: 1, 8, 128>}, {transform_indices = @transform_1, window_bounds = array<i64: 1, 8, 8>}, {transform_indices = @transform_2, window_bounds = array<i64: 1, 8, 1>}, {transform_indices = @transform_3, window_bounds = array<i64: 1, 8, 128>}, {transform_indices = @transform_4, window_bounds = array<i64: 1, 1, 1, 1>}, {transform_indices = @transform_5, window_bounds = array<i64: 1, 1, 1, 1>}]} {
    %c0 = arith.constant 0 : index
    %c0_0 = arith.constant 0 : index
    %c0_1 = arith.constant 0 : index
    %0 = vector.load %arg2[%c0, %c0_0, %c0_1] : memref<1x8x128xf32, #tpu.memory_space<vmem>>, vector<1x8x128xf32>
    %1 = vector.shape_cast %0 : vector<1x8x128xf32> to vector<8x128xf32>
    %c0_2 = arith.constant 0 : index
    %c0_3 = arith.constant 0 : index
    %c0_4 = arith.constant 0 : index
    %2 = vector.load %arg3[%c0_2, %c0_3, %c0_4] : memref<1x8x8xf32, #tpu.memory_space<vmem>>, vector<1x8x8xf32>
    %3 = vector.shape_cast %2 : vector<1x8x8xf32> to vector<8x8xf32>
    %cst = arith.constant dense<0.000000e+00> : vector<8x128xf32>
    %4 = tpu.matmul %3, %1, %cst {dimension_numbers = #tpu.dot_dimension_numbers<[1], [0], [0], [1], [0, 0, 1, 1], [], []>} : vector<8x8xf32>, vector<8x128xf32>, vector<8x128xf32> -> vector<8x128xf32>
    %c0_5 = arith.constant 0 : index
    %c0_6 = arith.constant 0 : index
    %c0_7 = arith.constant 0 : index
    %5 = vector.load %arg4[%c0_5, %c0_6, %c0_7] : memref<1x8x1xf32, #tpu.memory_space<vmem>>, vector<1x8x1xf32>
    %6 = vector.shape_cast %5 : vector<1x8x1xf32> to vector<8x1xf32>
    %7 = vector.broadcast %6 : vector<8x1xf32> to vector<8x128xf32>
    %8 = arith.mulf %4, %7 : vector<8x128xf32>
    %cst_8 = arith.constant dense<0.000000e+00> : vector<128xf32>
    %9 = vector.multi_reduction <add>, %8, %cst_8 [0] : vector<8x128xf32> to vector<128xf32>
    %10 = vector.shape_cast %9 : vector<128xf32> to vector<1x128xf32>
    %cst_9 = arith.constant 0.000000e+00 : f32
    %11 = vector.broadcast %cst_9 : f32 to vector<1x128xf32>
    %12 = arith.cmpf oeq, %10, %11 : vector<1x128xf32>
    %cst_10 = arith.constant 1.000000e+00 : f32
    %13 = vector.broadcast %cst_10 : f32 to vector<1x128xf32>
    %14 = arith.select %12, %13, %10 : vector<1x128xi1>, vector<1x128xf32>
    %15 = tpu.reciprocal %14 : vector<1x128xf32> -> vector<1x128xf32>
    %16 = vector.broadcast %15 : vector<1x128xf32> to vector<8x128xf32>
    %17 = arith.mulf %8, %16 : vector<8x128xf32>
    %c0_11 = arith.constant 0 : index
    %c0_12 = arith.constant 0 : index
    %c0_13 = arith.constant 0 : index
    %18 = vector.load %arg5[%c0_11, %c0_12, %c0_13] : memref<1x8x128xf32, #tpu.memory_space<vmem>>, vector<1x8x128xf32>
    %19 = vector.shape_cast %18 : vector<1x8x128xf32> to vector<8x128xf32>
    %20 = vector.shape_cast %17 : vector<8x128xf32> to vector<1x8x128xf32>
    tpu.vector_store %arg5[%c0_11, %c0_12, %c0_13], %20 {strides = array<i32>} : memref<1x8x128xf32, #tpu.memory_space<vmem>>, vector<1x8x128xf32>,
    %21 = math.log %14 : vector<1x128xf32>
    %22 = vector.shape_cast %21 : vector<1x128xf32> to vector<1x1x128xf32>
    %cst_14 = arith.constant dense<0.000000e+00> : vector<1xf32>
    %23 = vector.multi_reduction <add>, %22, %cst_14 [1, 2] : vector<1x1x128xf32> to vector<1xf32>
    %24 = vector.shape_cast %23 : vector<1xf32> to vector<1x1x1xf32>
    %25 = vector.extract %24[0, 0, 0] : f32 from vector<1x1x1xf32>
    %26 = vector.broadcast %25 : f32 to vector<1x1xf32>
    %c0_15 = arith.constant 0 : index
    %c0_16 = arith.constant 0 : index
    %c0_17 = arith.constant 0 : index
    %c0_18 = arith.constant 0 : index
    %27 = vector.load %arg6[%c0_15, %c0_16, %c0_17, %c0_18] : memref<1x1x1x1xf32, #tpu.memory_space<vmem>>, vector<1x1x1x1xf32>
    %28 = vector.shape_cast %27 : vector<1x1x1x1xf32> to vector<1x1xf32>
    %29 = vector.shape_cast %26 : vector<1x1xf32> to vector<1x1x1x1xf32>
    tpu.vector_store %arg6[%c0_15, %c0_16, %c0_17, %c0_18], %29 {strides = array<i32>} : memref<1x1x1x1xf32, #tpu.memory_space<vmem>>, vector<1x1x1x1xf32>,
    %cst_19 = arith.constant 0.000000e+00 : f32
    %30 = vector.broadcast %cst_19 : f32 to vector<8x128xf32>
    %31 = arith.cmpf ogt, %8, %30 : vector<8x128xf32>
    %32 = math.log %8 : vector<8x128xf32>
    %cst_20 = arith.constant 0.000000e+00 : f32
    %33 = vector.broadcast %cst_20 : f32 to vector<8x128xf32>
    %34 = arith.select %31, %32, %33 : vector<8x128xi1>, vector<8x128xf32>
    %35 = arith.mulf %17, %34 : vector<8x128xf32>
    %36 = vector.shape_cast %35 : vector<8x128xf32> to vector<1x8x128xf32>
    %cst_21 = arith.constant dense<0.000000e+00> : vector<1xf32>
    %37 = vector.multi_reduction <add>, %36, %cst_21 [1, 2] : vector<1x8x128xf32> to vector<1xf32>
    %38 = vector.shape_cast %37 : vector<1xf32> to vector<1x1x1xf32>
    %39 = vector.extract %38[0, 0, 0] : f32 from vector<1x1x1xf32>
    %40 = vector.broadcast %39 : f32 to vector<1x1xf32>
    %c0_22 = arith.constant 0 : index
    %c0_23 = arith.constant 0 : index
    %c0_24 = arith.constant 0 : index
    %c0_25 = arith.constant 0 : index
    %41 = vector.load %arg7[%c0_22, %c0_23, %c0_24, %c0_25] : memref<1x1x1x1xf32, #tpu.memory_space<vmem>>, vector<1x1x1x1xf32>
    %42 = vector.shape_cast %41 : vector<1x1x1x1xf32> to vector<1x1xf32>
    %43 = vector.shape_cast %40 : vector<1x1xf32> to vector<1x1x1x1xf32>
    tpu.vector_store %arg7[%c0_22, %c0_23, %c0_24, %c0_25], %43 {strides = array<i32>} : memref<1x1x1x1xf32, #tpu.memory_space<vmem>>, vector<1x1x1x1xf32>,
    return
  }
  func.func @transform_0(%arg0: i32, %arg1: i32) -> (i32, i32, i32) {
    %c0_i32 = arith.constant 0 : i32
    %c0_i32_0 = arith.constant 0 : i32
    return %arg0, %c0_i32, %arg1 : i32, i32, i32
  }
  func.func @transform_1(%arg0: i32, %arg1: i32) -> (i32, i32, i32) {
    %c0_i32 = arith.constant 0 : i32
    %c0_i32_0 = arith.constant 0 : i32
    %c0_i32_1 = arith.constant 0 : i32
    return %arg0, %c0_i32, %c0_i32_0 : i32, i32, i32
  }
  func.func @transform_2(%arg0: i32, %arg1: i32) -> (i32, i32, i32) {
    %c0_i32 = arith.constant 0 : i32
    %c0_i32_0 = arith.constant 0 : i32
    %c0_i32_1 = arith.constant 0 : i32
    return %arg0, %c0_i32, %c0_i32_0 : i32, i32, i32
  }
  func.func @transform_3(%arg0: i32, %arg1: i32) -> (i32, i32, i32) {
    %c0_i32 = arith.constant 0 : i32
    %c0_i32_0 = arith.constant 0 : i32
    return %arg0, %c0_i32, %arg1 : i32, i32, i32
  }
  func.func @transform_4(%arg0: i32, %arg1: i32) -> (i32, i32, i32, i32) {
    %c0_i32 = arith.constant 0 : i32
    %c0_i32_0 = arith.constant 0 : i32
    %c0_i32_1 = arith.constant 0 : i32
    return %arg0, %arg1, %c0_i32, %c0_i32_0 : i32, i32, i32, i32
  }
  func.func @transform_5(%arg0: i32, %arg1: i32) -> (i32, i32, i32, i32) {
    %c0_i32 = arith.constant 0 : i32
    %c0_i32_0 = arith.constant 0 : i32
    %c0_i32_1 = arith.constant 0 : i32
    return %arg0, %arg1, %c0_i32, %c0_i32_0 : i32, i32, i32, i32
  }
}

</mosaic_0001>

<llo_original>
// kernel: tpu_custom_call.1
$region0: #{tpu_custom_call.1}
  #allocation0 [shape = 'u32[]', space=smem, size = 0x4, offset = 0x4, fixed_abs, tag = 'smem constant byte address 0x4 - core index']
  #allocation1 [shape = 'u32[144,128]{1,0:T(1,128)}', space=vmem, size = 0x12000, scoped, tag = 'internal scratch']
  %s0 = inlined_call_operand.vmem [shape: f32[2,8,128], index: 0, kind: input, shape index: {}]
  %s1 = inlined_call_operand.hbm [shape: f32[2,8,8], index: 1, kind: input, shape index: {}]
  %s2 = inlined_call_operand.vmem [shape: f32[2,8,1], index: 2, kind: input, shape index: {}]
  %s3 = inlined_call_operand.hbm [shape: f32[2,8,128], index: 3, kind: output, shape index: {0}]
  %s4 = inlined_call_operand.vmem [shape: f32[2,1,1,1], index: 4, kind: output, shape index: {1}]
  %s5 = inlined_call_operand.vmem [shape: f32[2,1,1,1], index: 5, kind: output, shape index: {2}]
  %6 = xla_tuple %s3, %s4, %s5
  %s7 = sld [smem:[#allocation0]]
  $region65: #{tpu_custom_call.1} parent=0
    _
  %s9 = ssub.s32 1, %s7
  %s10 = scalar_select 0, %s9, %s7
  $region1: #{tpu_custom_call.1} parent=0
    #allocation2 [shape = 'u8[8192]{0}', space=vmem, size = 0x2000, scoped, tag = 'input window, operand 1']
    #allocation3 [shape = 's32[2]{0}', space=sflag, size = 0x8, scoped, tag = 'scoped memory for tpu_custom_call.1']
    #allocation4 [shape = 's32[2]{0}', space=sflag, size = 0x8, scoped, tag = 'scoped memory for tpu_custom_call.1']
    #allocation5 [shape = 'u8[8192]{0}', space=vmem, size = 0x2000, scoped, tag = 'output window, operand 0']
    %11 = vsyncpa [#allocation3], 0
    %s12 = scalar_lea.sflag [#allocation3], 1
    %13 = vsyncpa %s12, 0
    %14 = vsyncpa [#allocation4], 0
    %s15 = scalar_lea.sflag [#allocation4], 1
    %16 = vsyncpa %s15, 0
    loop: start=0, step=1, limit=4
    $region2: #{tpu_custom_call.1} parent=1 // loop_pre_header
      _
    $region3: #{tpu_custom_call.1} parent=1 // loop_header
      %s18 = sphi 0, %s22
      %p19 = scmp.ge.s32.totalorder %s18, 4
      %s25 = sphi 0, %s37
      %s26 = sphi 0, %s33
      %s27 = sphi 0, %s25
      %s28 = sphi 0, %s26
      %s29 = sphi 0, %s27
      %s30 = sphi 0, %s28
      %s42 = sphi 0, %s44
      %s45 = sphi 0, %s42
      %s46 = sphi 0, %s45
      %s62 = sphi 0, %s46
      %s68 = sphi 0, %s70
      %s71 = sphi 0, %s68
      %s72 = sphi 0, %s71
      %s88 = sphi 0, %s72
      %s94 = sphi 0, %s96
      %s97 = sphi 0, %s94
      %s98 = sphi 0, %s97
      %s114 = sphi 0, %s98
      %s122 = sphi 0, %s124
      %s125 = sphi 0, %s122
      %s126 = sphi 0, %s125
      %s142 = sphi 0, %s126
      %s150 = sphi 0, %s152
      %s153 = sphi 0, %s150
      %s154 = sphi 0, %s153
      %s170 = sphi 0, %s154
      %s178 = sphi 0, %s180
      %s181 = sphi 0, %s178
      %s182 = sphi 0, %s181
      %s198 = sphi 0, %s182
    $region4: #{tpu_custom_call.1} parent=1 // loop_header_branch
      %21 = sbr.rel (%p19) target = $region8
    $region5: #{tpu_custom_call.1} parent=1 // loop_body
      %s23 = ssub.s32 %s18, 1
      %s24 = ssub.s32 %s18, 2
      %s31 = sadd.s32 1, %s26
      %p32 = scmp.ge.s32.totalorder %s31, 1
      %s33 = scalar_select %p32, 0, %s31
      %s34 = sadd.s32 1, %s25
      %s35 = scalar_select %p32, %s34, %s25
      %p36 = scmp.ge.s32.totalorder %s35, 2
      %s37 = scalar_select %p36, 0, %s35
      %s38 = ssub.s32 %s25, %s37
      %s39 = ssub.s32 %s26, %s33
      %s40 = sor.u32 %s38, %s39
      %p41 = scmp.eq.s32.totalorder %s40, 0
      %s43 = sadd.s32 %s42, 1
      %s44 = scalar_select %p41, %s42, %s43
      %p47 = pneg %p41
      %p48 = scmp.eq.s32.totalorder %s18, 1
      %p49 = por %p47, %p48
      %p50 = scmp.ne.s32.totalorder %s42, %s45
      %p51 = scmp.eq.s32.totalorder %s18, 0
      %p52 = por %p50, %p51
      %p53 = scmp.ne.s32.totalorder %s42, %s45
      %p54 = scmp.eq.s32.totalorder %s23, 1
      %p55 = por %p53, %p54
      %p56 = scmp.ne.s32.totalorder %s45, %s46
      %p57 = scmp.eq.s32.totalorder %s23, 0
      %p58 = por %p56, %p57
      %p59 = scmp.ne.s32.totalorder %s45, %s46
      %p60 = scmp.eq.s32.totalorder %s24, 1
      %p61 = por %p59, %p60
      %p63 = scmp.ne.s32.totalorder %s46, %s62
      %p64 = scmp.eq.s32.totalorder %s24, 0
      %p65 = por %p63, %p64
      %s66 = ssub.s32 %s25, %s37
      %p67 = scmp.eq.s32.totalorder %s66, 0
      %s69 = sadd.s32 %s68, 1
      %s70 = scalar_select %p67, %s68, %s69
      %p73 = pneg %p67
      %p74 = scmp.eq.s32.totalorder %s18, 1
      %p75 = por %p73, %p74
      %p76 = scmp.ne.s32.totalorder %s68, %s71
      %p77 = scmp.eq.s32.totalorder %s18, 0
      %p78 = por %p76, %p77
      %p79 = scmp.ne.s32.totalorder %s68, %s71
      %p80 = scmp.eq.s32.totalorder %s23, 1
      %p81 = por %p79, %p80
      %p82 = scmp.ne.s32.totalorder %s71, %s72
      %p83 = scmp.eq.s32.totalorder %s23, 0
      %p84 = por %p82, %p83
      %p85 = scmp.ne.s32.totalorder %s71, %s72
      %p86 = scmp.eq.s32.totalorder %s24, 1
      %p87 = por %p85, %p86
      %p89 = scmp.ne.s32.totalorder %s72, %s88
      %p90 = scmp.eq.s32.totalorder %s24, 0
      %p91 = por %p89, %p90
      %s92 = ssub.s32 %s25, %s37
      %p93 = scmp.eq.s32.totalorder %s92, 0
      %s95 = sadd.s32 %s94, 1
      %s96 = scalar_select %p93, %s94, %s95
      %p99 = pneg %p93
      %p100 = scmp.eq.s32.totalorder %s18, 1
      %p101 = por %p99, %p100
      %p102 = scmp.ne.s32.totalorder %s94, %s97
      %p103 = scmp.eq.s32.totalorder %s18, 0
      %p104 = por %p102, %p103
      %p105 = scmp.ne.s32.totalorder %s94, %s97
      %p106 = scmp.eq.s32.totalorder %s23, 1
      %p107 = por %p105, %p106
      %p108 = scmp.ne.s32.totalorder %s97, %s98
      %p109 = scmp.eq.s32.totalorder %s23, 0
      %p110 = por %p108, %p109
      %p111 = scmp.ne.s32.totalorder %s97, %s98
      %p112 = scmp.eq.s32.totalorder %s24, 1
      %p113 = por %p111, %p112
      %p115 = scmp.ne.s32.totalorder %s98, %s114
      %p116 = scmp.eq.s32.totalorder %s24, 0
      %p117 = por %p115, %p116
      %s118 = ssub.s32 %s25, %s37
      %s119 = ssub.s32 %s26, %s33
      %s120 = sor.u32 %s118, %s119
      %p121 = scmp.eq.s32.totalorder %s120, 0
      %s123 = sadd.s32 %s122, 1
      %s124 = scalar_select %p121, %s122, %s123
      %p127 = pneg %p121
      %p128 = scmp.eq.s32.totalorder %s18, 1
      %p129 = por %p127, %p128
      %p130 = scmp.ne.s32.totalorder %s122, %s125
      %p131 = scmp.eq.s32.totalorder %s18, 0
      %p132 = por %p130, %p131
      %p133 = scmp.ne.s32.totalorder %s122, %s125
      %p134 = scmp.eq.s32.totalorder %s23, 1
      %p135 = por %p133, %p134
      %p136 = scmp.ne.s32.totalorder %s125, %s126
      %p137 = scmp.eq.s32.totalorder %s23, 0
      %p138 = por %p136, %p137
      %p139 = scmp.ne.s32.totalorder %s125, %s126
      %p140 = scmp.eq.s32.totalorder %s24, 1
      %p141 = por %p139, %p140
      %p143 = scmp.ne.s32.totalorder %s126, %s142
      %p144 = scmp.eq.s32.totalorder %s24, 0
      %p145 = por %p143, %p144
      %s146 = ssub.s32 %s25, %s37
      %s147 = ssub.s32 %s26, %s33
      %s148 = sor.u32 %s146, %s147
      %p149 = scmp.eq.s32.totalorder %s148, 0
      %s151 = sadd.s32 %s150, 1
      %s152 = scalar_select %p149, %s150, %s151
      %p155 = pneg %p149
      %p156 = scmp.eq.s32.totalorder %s18, 1
      %p157 = por %p155, %p156
      %p158 = scmp.ne.s32.totalorder %s150, %s153
      %p159 = scmp.eq.s32.totalorder %s18, 0
      %p160 = por %p158, %p159
      %p161 = scmp.ne.s32.totalorder %s150, %s153
      %p162 = scmp.eq.s32.totalorder %s23, 1
      %p163 = por %p161, %p162
      %p164 = scmp.ne.s32.totalorder %s153, %s154
      %p165 = scmp.eq.s32.totalorder %s23, 0
      %p166 = por %p164, %p165
      %p167 = scmp.ne.s32.totalorder %s153, %s154
      %p168 = scmp.eq.s32.totalorder %s24, 1
      %p169 = por %p167, %p168
      %p171 = scmp.ne.s32.totalorder %s154, %s170
      %p172 = scmp.eq.s32.totalorder %s24, 0
      %p173 = por %p171, %p172
      %s174 = ssub.s32 %s25, %s37
      %s175 = ssub.s32 %s26, %s33
      %s176 = sor.u32 %s174, %s175
      %p177 = scmp.eq.s32.totalorder %s176, 0
      %s179 = sadd.s32 %s178, 1
      %s180 = scalar_select %p177, %s178, %s179
      %p183 = pneg %p177
      %p184 = scmp.eq.s32.totalorder %s18, 1
      %p185 = por %p183, %p184
      %p186 = scmp.ne.s32.totalorder %s178, %s181
      %p187 = scmp.eq.s32.totalorder %s18, 0
      %p188 = por %p186, %p187
      %p189 = scmp.ne.s32.totalorder %s178, %s181
      %p190 = scmp.eq.s32.totalorder %s23, 1
      %p191 = por %p189, %p190
      %p192 = scmp.ne.s32.totalorder %s181, %s182
      %p193 = scmp.eq.s32.totalorder %s23, 0
      %p194 = por %p192, %p193
      %p195 = scmp.ne.s32.totalorder %s181, %s182
      %p196 = scmp.eq.s32.totalorder %s24, 1
      %p197 = por %p195, %p196
      %p199 = scmp.ne.s32.totalorder %s182, %s198
      %p200 = scmp.eq.s32.totalorder %s24, 0
      %p201 = por %p199, %p200
      %p202 = scmp.le.s32.totalorder 1, %s18
      %p203 = scmp.lt.s32.totalorder %s18, 3
      %p204 = pnand %p202, %p203
      %p205 = pneg %p204
      // Predicated region
      $region9: #{tpu_custom_call.1} parent=5 // pred_check
        _
      $region10: #{tpu_custom_call.1} parent=5 // pred_check_branch
        %207 = sbr.rel (%p204) target = $region12
      $region11: #{tpu_custom_call.1} parent=5 // pred_region
        %s208 = ssub.s32 %s18, 1
      $region12: #{tpu_custom_call.1} parent=5 // pred_fallthru
        _
      %p209 = scmp.lt.s32.totalorder %s18, 2
      // Predicated region
      $region13: #{tpu_custom_call.1} parent=5 // pred_check
        %p210 = pneg %p209
      $region14: #{tpu_custom_call.1} parent=5 // pred_check_branch
        %212 = sbr.rel (%p210) target = $region16
      $region15: #{tpu_custom_call.1} parent=5 // pred_region
        // Predicated region
        $region17: #{tpu_custom_call.1} parent=15 // pred_check
          %p213 = pneg %p52
        $region18: #{tpu_custom_call.1} parent=15 // pred_check_branch
          %215 = sbr.rel (%p213) target = $region20
        $region19: #{tpu_custom_call.1} parent=15 // pred_region
          %p216 = scmp.lt.s32.totalorder %s25, 1
          %s217 = scalar_select %p216, %s25, 1
          %p218 = scmp.lt.s32.totalorder %s26, 0
          %s219 = scalar_select %p218, %s26, 0
          %s220 = sadd.s32 %s219, %s217
          %s221 = smul.addr %s220, 8
          %s222 = scalar_lea.vmem %s0, %s221
        $region20: #{tpu_custom_call.1} parent=15 // pred_fallthru
          _
        // Predicated region
        $region21: #{tpu_custom_call.1} parent=15 // pred_check
          %p223 = pneg %p78
        $region22: #{tpu_custom_call.1} parent=15 // pred_check_branch
          %225 = sbr.rel (%p223) target = $region24
        $region23: #{tpu_custom_call.1} parent=15 // pred_region
          %s226 = sand.u32 %s68, 1
          %s227 = scalar_lea.sflag [#allocation3], %s226
          %s228 = sand.u32 %s68, 1
          %s229 = smul.addr %s228, 8
          %s230 = scalar_lea.vmem [#allocation2], %s229
          %s232 = ssub.s32 128, 128
          %233 = vsyncadd %s227, %s232
          %s234 = smul.addr %s25, 128
          %s235 = scalar_lea.hbm %s1, %s234
          %s237 = sshll.u32 %s230, 4
          %s238 = int_to_ptr.vmem [resolvable:$true] %s237
          %240 = dma.hbm_to_vmem [thread:$0]  %s235, 128, %s238, %s227
        $region24: #{tpu_custom_call.1} parent=15 // pred_fallthru
          _
        // Predicated region
        $region25: #{tpu_custom_call.1} parent=15 // pred_check
          %p241 = pneg %p104
        $region26: #{tpu_custom_call.1} parent=15 // pred_check_branch
          %243 = sbr.rel (%p241) target = $region28
        $region27: #{tpu_custom_call.1} parent=15 // pred_region
          %p244 = scmp.lt.s32.totalorder %s25, 1
          %s245 = scalar_select %p244, %s25, 1
          %s246 = smul.addr %s245, 8
          %s247 = scalar_lea.vmem %s2, %s246
        $region28: #{tpu_custom_call.1} parent=15 // pred_fallthru
          _
      $region16: #{tpu_custom_call.1} parent=5 // pred_fallthru
        _
      %p248 = scmp.le.s32.totalorder 1, %s18
      %p249 = scmp.lt.s32.totalorder %s18, 3
      %p250 = pnand %p248, %p249
      %p251 = pneg %p250
      // Predicated region
      $region29: #{tpu_custom_call.1} parent=5 // pred_check
        _
      $region30: #{tpu_custom_call.1} parent=5 // pred_check_branch
        %253 = sbr.rel (%p250) target = $region32
      $region31: #{tpu_custom_call.1} parent=5 // pred_region
        %s254 = ssub.s32 %s18, 1
        %s255 = sand.u32 %s71, 1
        %s256 = scalar_lea.sflag [#allocation3], %s255
        %s257 = sand.u32 %s71, 1
        %s258 = smul.addr %s257, 8
        %s259 = scalar_lea.vmem [#allocation2], %s258
        // Predicated region
        $region33: #{tpu_custom_call.1} parent=31 // pred_check
          %p260 = pneg %p84
        $region34: #{tpu_custom_call.1} parent=31 // pred_check_branch
          %262 = sbr.rel (%p260) target = $region36
        $region35: #{tpu_custom_call.1} parent=31 // pred_region
          %263 = dma.done %s256, 128
        $region36: #{tpu_custom_call.1} parent=31 // pred_fallthru
          _
        %p264 = scmp.lt.s32.totalorder %s27, 1
        %s265 = scalar_select %p264, %s27, 1
        %p266 = scmp.lt.s32.totalorder %s28, 0
        %s267 = scalar_select %p266, %s28, 0
        %s268 = sadd.s32 %s267, %s265
        %s269 = smul.addr %s268, 8
        %s270 = scalar_lea.vmem %s0, %s269
        %p271 = pneg %p58
        %p272 = pneg %p55
        %s273 = sand.u32 %s71, 1
        %s274 = scalar_lea.sflag [#allocation3], %s273
        %s275 = sand.u32 %s71, 1
        %s276 = smul.addr %s275, 8
        %s277 = scalar_lea.vmem [#allocation2], %s276
        %p278 = pneg %p84
        %p279 = pneg %p81
        %p280 = scmp.lt.s32.totalorder %s27, 1
        %s281 = scalar_select %p280, %s27, 1
        %s282 = smul.addr %s281, 8
        %s283 = scalar_lea.vmem %s2, %s282
        %p284 = pneg %p110
        %p285 = pneg %p107
        %p286 = pneg %p138
        %p287 = pneg %p135
        %s288 = sand.u32 %s125, 1
        %s289 = scalar_lea.sflag [#allocation4], %s288
        %s290 = sand.u32 %s125, 1
        %s291 = smul.addr %s290, 8
        %s292 = scalar_lea.vmem [#allocation5], %s291
        %p293 = pneg %p166
        %p294 = pneg %p163
        %p295 = scmp.lt.s32.totalorder %s27, 1
        %s296 = scalar_select %p295, %s27, 1
        %p297 = scmp.lt.s32.totalorder %s28, 0
        %s298 = scalar_select %p297, %s28, 0
        %s299 = sadd.s32 %s298, %s296
        %s300 = scalar_lea.vmem %s4, %s299
        %p301 = pneg %p194
        %p302 = pneg %p191
        %p303 = scmp.lt.s32.totalorder %s27, 1
        %s304 = scalar_select %p303, %s27, 1
        %p305 = scmp.lt.s32.totalorder %s28, 0
        %s306 = scalar_select %p305, %s28, 0
        %s307 = sadd.s32 %s306, %s304
        %s308 = scalar_lea.vmem %s5, %s307
        %p309 = scmp.lt.s32.totalorder %s27, 1
        %s310 = scalar_select %p309, %s27, 1
        %p311 = scmp.lt.s32.totalorder %s28, 0
        %s312 = scalar_select %p311, %s28, 0
        %s313 = sadd.s32 %s312, %s310
        %s314 = smul.addr %s313, 8
        %s315 = scalar_lea.vmem %s0, %s314
        %p316 = scmp.lt.s32.totalorder %s27, 1
        %s317 = scalar_select %p316, %s27, 1
        %s318 = smul.addr %s317, 8
        %s319 = scalar_lea.vmem %s2, %s318
        %p320 = scmp.lt.s32.totalorder %s27, 1
        %s321 = scalar_select %p320, %s27, 1
        %p322 = scmp.lt.s32.totalorder %s28, 0
        %s323 = scalar_select %p322, %s28, 0
        %s324 = sadd.s32 %s323, %s321
        %s325 = scalar_lea.vmem %s4, %s324
        %p326 = scmp.lt.s32.totalorder %s27, 1
        %s327 = scalar_select %p326, %s27, 1
        %p328 = scmp.lt.s32.totalorder %s28, 0
        %s329 = scalar_select %p328, %s28, 0
        %s330 = sadd.s32 %s329, %s327
        %s331 = scalar_lea.vmem %s5, %s330
        %v332 = vld [vmem:[%s315] sm:$0xff]
        %v333 = vld [vmem:[%s259] sm:$0xff]
        %vm334 = vcmask 64512
        %v336 = vsel %vm334, %v333, 0
        %338 = vmatprep.subr.mxu0 0.0
        %339 = vmatpush1.msra.mxu0 %v332
        %340 = vmatprep.subr.mxu0 0.0
        %341 = vmatpush1.msra.mxu0 0.0
        %342 = vmatprep.subr.mxu0 0.0
        %343 = vmatpush1.msra.mxu0 0.0
        %344 = vmatprep.subr.mxu0 0.0
        %345 = vmatpush1.msra.mxu0 0.0
        %346 = vmatprep.subr.mxu0 0.0
        %347 = vmatpush1.msra.mxu0 0.0
        %348 = vmatprep.subr.mxu0 0.0
        %349 = vmatpush1.msra.mxu0 0.0
        %350 = vmatprep.subr.mxu0 0.0
        %351 = vmatpush1.msra.mxu0 0.0
        %352 = vmatprep.subr.mxu0 0.0
        %353 = vmatpush1.msra.mxu0 0.0
        %354 = vmatprep.subr.mxu0 0.0
        %355 = vmatpush1.msra.mxu0 0.0
        %356 = vmatprep.subr.mxu0 0.0
        %357 = vmatpush1.msra.mxu0 0.0
        %358 = vmatprep.subr.mxu0 0.0
        %359 = vmatpush1.msra.mxu0 0.0
        %360 = vmatprep.subr.mxu0 0.0
        %361 = vmatpush1.msra.mxu0 0.0
        %362 = vmatprep.subr.mxu0 0.0
        %363 = vmatpush1.msra.mxu0 0.0
        %364 = vmatprep.subr.mxu0 0.0
        %365 = vmatpush1.msra.mxu0 0.0
        %366 = vmatprep.subr.mxu0 0.0
        %367 = vmatpush1.msra.mxu0 0.0
        %368 = vmatprep.subr.mxu0 0.0
        %369 = vmatpush1.msra.mxu0 0.0
        %370 = vmatprep.subr.mxu0 0.0
        %371 = vmatpush1.msra.mxu0 0.0
        %372 = vmatprep.subr.mxu0 0.0
        %373 = vmatpush1.msra.mxu0 0.0
        %374 = vmatprep.subr.mxu0 0.0
        %375 = vmatpush1.msra.mxu0 0.0
        %376 = vmatprep.subr.mxu0 0.0
        %377 = vmatpush1.msra.mxu0 0.0
        %378 = vmatprep.subr.mxu0 0.0
        %379 = vmatpush1.msra.mxu0 0.0
        %380 = vmatprep.subr.mxu0 0.0
        %381 = vmatpush1.msra.mxu0 0.0
        %382 = vmatprep.subr.mxu0 0.0
        %383 = vmatpush1.msra.mxu0 0.0
        %384 = vmatprep.subr.mxu0 0.0
        %385 = vmatpush1.msra.mxu0 0.0
        %386 = vmatprep.subr.mxu0 0.0
        %387 = vmatpush1.msra.mxu0 0.0
        %388 = vmatprep.subr.mxu0 0.0
        %389 = vmatpush1.msra.mxu0 0.0
        %390 = vmatprep.subr.mxu0 0.0
        %391 = vmatpush1.msra.mxu0 0.0
        %392 = vmatprep.subr.mxu0 0.0
        %393 = vmatpush1.msra.mxu0 0.0
        %394 = vmatprep.subr.mxu0 0.0
        %395 = vmatpush1.msra.mxu0 0.0
        %396 = vmatprep.subr.mxu0 0.0
        %397 = vmatpush1.msra.mxu0 0.0
        %398 = vmatprep.subr.mxu0 0.0
        %399 = vmatpush1.msra.mxu0 0.0
        %400 = vmatprep.subr.mxu0 0.0
        %401 = vmatpush1.msra.mxu0 0.0
        %402 = vmatprep.mubr.f32.mxu0 0.0
        %403 = vmatmul.mubr.f32.gmra.mrb[0].mxu0 %v336
        %v404 = vpop.f32.mrb[0].mxu0
        %v405 = vadd.f32 0.0, %v404
        %v406 = vpop.f32.mrb[0].mxu0
        %407 = vdwg.mxu0
        %v408 = vld [vmem:[%s319] sm:$0xff]
        %410 = vset.pattern.permute.xlu0 0
        %411 = vperm.xlu0 %410, %v408
        %v412 = vpop.permute.xlu0 %411
        %v414 = vmul.f32 %v405, %v412
        %v415 = vrot.slane %v414, 4
        %v416 = vadd.f32 %v414, %v415
        %v417 = vrot.slane %v416, 2
        %v418 = vadd.f32 %v416, %v417
        %v419 = vrot.slane %v418, 1
        %v420 = vadd.f32 %v418, %v419
        %vm421 = vcmp.eq.f32.partialorder %v420, 0.0
        %v422 = vsel %vm421, 1.0, %v420
        %v423 = vrcp.pop %v422
        %v424 = vmul.f32 %v414, %v423
        %425 = vst [vmem:[%s292] sm:$0xff] %v424
        %v426 = vlog2.pop %v422
        %v427 = vmul.f32 %v426, 0.6931472
        %vm428 = vcmask 1040384
        %v429 = vsel %vm428, %v427, 0.0
        %430 = vadd.xlane.f32.xlu0 %v429
        %v431 = vpop.xlane.xlu0 %430
        %v432 = vrot.slane %v431, 4
        %v433 = vadd.f32 %v431, %v432
        %v434 = vrot.slane %v433, 2
        %v435 = vadd.f32 %v433, %v434
        %v436 = vrot.slane %v435, 1
        %v437 = vadd.f32 %v435, %v436
        %s438 = vtos %v437
        %v439 = vstv %s438
        %vm440 = vcmask 0
        %441 = vst.msk [vmem:[%s325] sm:$0x1] %vm440, %v439
        %vm442 = vcmp.gt.f32.partialorder %v414, 0.0
        %v443 = vlog2.pop %v414
        %v444 = vmul.f32 %v443, 0.6931472
        %v445 = vsel %vm442, %v444, 0.0
        %v446 = vmul.f32 %v424, %v445
        %447 = vadd.xlane.f32.xlu0 %v446
        %v448 = vpop.xlane.xlu0 %447
        %v449 = vrot.slane %v448, 4
        %v450 = vadd.f32 %v448, %v449
        %v451 = vrot.slane %v450, 2
        %v452 = vadd.f32 %v450, %v451
        %v453 = vrot.slane %v452, 1
        %v454 = vadd.f32 %v452, %v453
        %s455 = vtos %v454
        %v456 = vstv %s455
        %457 = vst.msk [vmem:[%s331] sm:$0x1] %vm440, %v456
        %s458 = sand.u32 %s125, 1
        %s459 = scalar_lea.sflag [#allocation4], %s458
        %s460 = sand.u32 %s125, 1
        %s461 = smul.addr %s460, 8
        %s462 = scalar_lea.vmem [#allocation5], %s461
        %p463 = scmp.lt.s32.totalorder %s27, 1
        %s464 = scalar_select %p463, %s27, 1
        %p465 = scmp.lt.s32.totalorder %s28, 0
        %s466 = scalar_select %p465, %s28, 0
        %s467 = sadd.s32 %s466, %s464
        %s468 = scalar_lea.vmem %s4, %s467
        %p469 = scmp.lt.s32.totalorder %s27, 1
        %s470 = scalar_select %p469, %s27, 1
        %p471 = scmp.lt.s32.totalorder %s28, 0
        %s472 = scalar_select %p471, %s28, 0
        %s473 = sadd.s32 %s472, %s470
        %s474 = scalar_lea.vmem %s5, %s473
        // Predicated region
        $region37: #{tpu_custom_call.1} parent=31 // pred_check
          %p475 = pneg %p135
        $region38: #{tpu_custom_call.1} parent=31 // pred_check_branch
          %477 = sbr.rel (%p475) target = $region40
        $region39: #{tpu_custom_call.1} parent=31 // pred_region
          %s479 = ssub.s32 128, 128
          %480 = vsyncadd %s459, %s479
          %s481 = sadd.s32 %s28, %s27
          %s482 = smul.addr %s481, 128
          %s483 = scalar_lea.hbm %s3, %s482
          %s485 = sshll.u32 %s462, 4
          %s486 = int_to_ptr.vmem [resolvable:$true] %s485
          %488 = dma.vmem_to_hbm [thread:$0]  %s486, 128, %s483, %s459
        $region40: #{tpu_custom_call.1} parent=31 // pred_fallthru
          _
        // Predicated region
        $region41: #{tpu_custom_call.1} parent=31 // pred_check
          %p489 = pneg %p163
        $region42: #{tpu_custom_call.1} parent=31 // pred_check_branch
          %491 = sbr.rel (%p489) target = $region44
        $region43: #{tpu_custom_call.1} parent=31 // pred_region
          _
        $region44: #{tpu_custom_call.1} parent=31 // pred_fallthru
          _
        // Predicated region
        $region45: #{tpu_custom_call.1} parent=31 // pred_check
          %p492 = pneg %p191
        $region46: #{tpu_custom_call.1} parent=31 // pred_check_branch
          %494 = sbr.rel (%p492) target = $region48
        $region47: #{tpu_custom_call.1} parent=31 // pred_region
          _
        $region48: #{tpu_custom_call.1} parent=31 // pred_fallthru
          _
      $region32: #{tpu_custom_call.1} parent=5 // pred_fallthru
        _
      %p495 = scmp.le.s32.totalorder 2, %s18
      // Predicated region
      $region49: #{tpu_custom_call.1} parent=5 // pred_check
        %p496 = pneg %p495
      $region50: #{tpu_custom_call.1} parent=5 // pred_check_branch
        %498 = sbr.rel (%p496) target = $region52
      $region51: #{tpu_custom_call.1} parent=5 // pred_region
        %s499 = ssub.s32 %s18, 2
        // Predicated region
        $region53: #{tpu_custom_call.1} parent=51 // pred_check
          %p500 = pneg %p141
        $region54: #{tpu_custom_call.1} parent=51 // pred_check_branch
          %502 = sbr.rel (%p500) target = $region56
        $region55: #{tpu_custom_call.1} parent=51 // pred_region
          %s503 = sand.u32 %s126, 1
          %s504 = scalar_lea.sflag [#allocation4], %s503
          %s505 = sand.u32 %s126, 1
          %s506 = smul.addr %s505, 8
          %s507 = scalar_lea.vmem [#allocation5], %s506
          %508 = dma.done %s504, 128
        $region56: #{tpu_custom_call.1} parent=51 // pred_fallthru
          _
        // Predicated region
        $region57: #{tpu_custom_call.1} parent=51 // pred_check
          %p509 = pneg %p169
        $region58: #{tpu_custom_call.1} parent=51 // pred_check_branch
          %511 = sbr.rel (%p509) target = $region60
        $region59: #{tpu_custom_call.1} parent=51 // pred_region
          %p512 = scmp.lt.s32.totalorder %s29, 1
          %s513 = scalar_select %p512, %s29, 1
          %p514 = scmp.lt.s32.totalorder %s30, 0
          %s515 = scalar_select %p514, %s30, 0
          %s516 = sadd.s32 %s515, %s513
          %s517 = scalar_lea.vmem %s4, %s516
        $region60: #{tpu_custom_call.1} parent=51 // pred_fallthru
          _
        // Predicated region
        $region61: #{tpu_custom_call.1} parent=51 // pred_check
          %p518 = pneg %p197
        $region62: #{tpu_custom_call.1} parent=51 // pred_check_branch
          %520 = sbr.rel (%p518) target = $region64
        $region63: #{tpu_custom_call.1} parent=51 // pred_region
          %p521 = scmp.lt.s32.totalorder %s29, 1
          %s522 = scalar_select %p521, %s29, 1
          %p523 = scmp.lt.s32.totalorder %s30, 0
          %s524 = scalar_select %p523, %s30, 0
          %s525 = sadd.s32 %s524, %s522
          %s526 = scalar_lea.vmem %s5, %s525
        $region64: #{tpu_custom_call.1} parent=51 // pred_fallthru
          _
      $region52: #{tpu_custom_call.1} parent=5 // pred_fallthru
        _
    $region6: #{tpu_custom_call.1} parent=1 // loop_footer
      %s22 = sadd.s32 1, %s18
    $region7: #{tpu_custom_call.1} parent=1 // loop_footer_branch
      %17 = sbr.rel target = $region3
    $region8: #{tpu_custom_call.1} parent=1 // loop_exit
      _
    %527 = vsyncpa [#allocation3], 1
    %s528 = scalar_lea.sflag [#allocation3], 1
    %529 = vsyncpa %s528, 1
    %530 = vsyncpa [#allocation4], 1
    %s531 = scalar_lea.sflag [#allocation4], 1
    %532 = vsyncpa %s531, 1

</llo_original>
